<compile_context>
chip_gen: v5e
topology: v5e:2x2
jax: 0.10.0
libtpu: 0.0.40
codegen_flags: <defaults>
</compile_context>

<pallas_src>
import functools

import jax
import jax.numpy as jnp
from jax.experimental import pallas as pl
from jax.experimental.pallas import tpu as pltpu

INPUT_DIM = 4
ACTION_DIM = 3
NUM_CLASSES = 6
HIDDEN_DIM = 128
FEAT_DIM = INPUT_DIM + NUM_CLASSES + (ACTION_DIM - 1)   # 4 + 6 + 2 = 12
FEAT_PAD = 16                                           # one MXU K pass

# Row layout of the packed feature-major input / W1 slab:
#   rows 0-3   : in_comp
#   rows 4-9   : one-hot(pair_idx)   (built in-kernel; wrapper leaves zeros)
#   rows 10-11 : recovs
#   row  12    : constant 1.0        (b1 folded into W1 slab row 12)
#   row  13    : stashed pair_idx    (W1 slab row 13 is zero -> contributes 0)
#   rows 14-15 : zero padding to K=16
ONEHOT_START = INPUT_DIM
ONEHOT_END = INPUT_DIM + NUM_CLASSES
ONES_ROW = 12
PAIR_ROW = 13

# Per-tile footprint at 4096 (f32): input dbuf ~0.5 MiB + feat/h1/h2 temps
# ~6-7 MiB + resident weights <0.5 MiB  =>  well under the 32 MiB scoped VMEM
# limit on every generation (v7x included).
MAX_TILE_BATCH = 4096


def _round_up(x, m):
    return ((x + m - 1) // m) * m


def _cdiv(a, b):
    return -(-a // b)


def _critic_kernel(x_ref, w1t_ref, w2t_ref, b2_ref, w3_ref, b3_ref, o_ref):
    """q = W3 @ relu(W2 @ relu(W1s @ feat) + b2) + b3, feature-major layout."""
    x = x_ref[...]                                        # (16, TM) f32
    tm = x.shape[1]

    # Build the (16, TM) feature slab with pure VPU work (no lane/sublane
    # concatenation): only the one-hot rows need filling; the stashed
    # pair-index row is multiplied by a zero W1 row, so it never matters.
    row = jax.lax.broadcasted_iota(jnp.int32, (FEAT_PAD, tm), 0)
    pair_idx = x[PAIR_ROW:PAIR_ROW + 1, :].astype(jnp.int32)   # trunc, like .long()
    onehot_hit = ((row >= ONEHOT_START) & (row < ONEHOT_END)
                  & (pair_idx == row - ONEHOT_START))
    feat = jnp.where(onehot_hit, 1.0, x)                  # (16, TM) f32

    dot_dtype = w1t_ref.dtype                             # f32 or bf16 (wrapper choice)

    # Layer 1: single fused K=16 MXU pass; bias is the ONES_ROW column of W1.
    h1 = jnp.dot(w1t_ref[...], feat.astype(dot_dtype),
                 preferred_element_type=jnp.float32)      # (128, TM) f32
    h1 = jnp.maximum(h1, 0.0)

    # Layer 2: dominant 128x128 MXU matmul.
    h2 = jnp.dot(w2t_ref[...], h1.astype(dot_dtype),
                 preferred_element_type=jnp.float32) + b2_ref[...]
    h2 = jnp.maximum(h2, 0.0)                             # (128, TM) f32

    # Layer 3 (N=1): VPU broadcast-multiply + sublane reduction.  The result
    # is already lane-major (1, TM), so the store is unmasked and needs no
    # sublane->lane transpose.  b3 is a scalar read from SMEM.
    q = jnp.sum(h2 * w3_ref[...], axis=0, keepdims=True) + b3_ref[0, 0]
    o_ref[...] = q                                        # (1, TM)


def column_critic_forward(params, in_comp, action, *, block_batch=None,
                          matmul_dtype=jnp.float32):
    """Reproduces ColumnCritic.forward.

    in_comp: (B, 4) float32
    action:  (B, 3) float32 -> [pair_index (integer-valued), recov_lk, recov_hk]
    matmul_dtype: jnp.float32 (default, matches the torch module) or
                  jnp.bfloat16 (faster MXU path, ~1e-2 relative deviation).
    returns: (B,) float32
    """
    w1, b1, w2, b2, w3, b3 = params
    B = in_comp.shape[0]

    # --- batch tiling -------------------------------------------------------
    if block_batch is None:
        b_ceil = _round_up(max(B, 1), 128)
        n_tiles = max(1, _cdiv(b_ceil, MAX_TILE_BATCH))
        if b_ceil > 128:
            # >=2 tiles so both v7x TensorCores get work; on 1-TC chips the
            # extra grid step costs only ~0.35us.
            n_tiles = max(n_tiles, 2)
        block_batch = min(MAX_TILE_BATCH, _round_up(_cdiv(b_ceil, n_tiles), 128))
    tm = block_batch
    assert tm % 128 == 0, "block_batch must be a multiple of 128"
    num_tiles = _cdiv(B, tm)
    b_pad = num_tiles * tm

    in_comp = in_comp.astype(jnp.float32)
    action = action.astype(jnp.float32)
    recovs = action[:, 1:]                                # (B, 2)
    pair_col = action[:, 0:1]                             # (B, 1)

    # Packed feature-major input: one (16, B) slab, built in a single pass
    # (the only extra copy is the tail pad when B isn't a multiple of 128).
    x16 = jnp.concatenate([
        in_comp.T,                                        # rows 0-3
        jnp.zeros((NUM_CLASSES, B), jnp.float32),         # rows 4-9 (one-hot in-kernel)
        recovs.T,                                         # rows 10-11
        jnp.ones((1, B), jnp.float32),                    # row 12: bias column
        pair_col.T,                                       # row 13: stashed pair index
        jnp.zeros((FEAT_PAD - PAIR_ROW - 1, B), jnp.float32),  # rows 14-15
    ], axis=0)                                            # (16, B)
    if b_pad != B:
        x16 = jnp.pad(x16, ((0, 0), (0, b_pad - B)))

    # Weight prep (tiny, done once per call): fused W1 slab with b1 folded in.
    w1_slab = jnp.zeros((FEAT_PAD, HIDDEN_DIM), jnp.float32)
    w1_slab = w1_slab.at[:FEAT_DIM].set(w1)
    w1_slab = w1_slab.at[ONES_ROW].set(b1.reshape(HIDDEN_DIM))
    w1t = w1_slab.T.astype(matmul_dtype)                  # (128, 16)
    w2t = w2.T.astype(matmul_dtype)                       # (128, 128)
    b2c = b2.reshape(HIDDEN_DIM, 1).astype(jnp.float32)   # (128, 1)
    w3c = w3.reshape(HIDDEN_DIM, 1).astype(jnp.float32)   # (128, 1)
    b3s = b3.reshape(1, 1).astype(jnp.float32)            # scalar -> SMEM

    out = pl.pallas_call(
        _critic_kernel,
        out_shape=jax.ShapeDtypeStruct((1, b_pad), jnp.float32),
        grid=(num_tiles,),
        in_specs=[
            # streamed activations: one batch tile (lanes) per grid step
            pl.BlockSpec((FEAT_PAD, tm), lambda i: (0, i)),
            # parameters: constant index_map -> VMEM-resident across tiles
            pl.BlockSpec((HIDDEN_DIM, FEAT_PAD), lambda i: (0, 0)),
            pl.BlockSpec((HIDDEN_DIM, HIDDEN_DIM), lambda i: (0, 0)),
            pl.BlockSpec((HIDDEN_DIM, 1), lambda i: (0, 0)),
            pl.BlockSpec((HIDDEN_DIM, 1), lambda i: (0, 0)),
            # scalar bias in SMEM (whole array, no blocking)
            pl.BlockSpec(memory_space=pltpu.MemorySpace.SMEM),
        ],
        out_specs=pl.BlockSpec((1, tm), lambda i: (0, i)),
        compiler_params=pltpu.CompilerParams(
            dimension_semantics=("parallel",),   # megacore split on v7x
            vmem_limit_bytes=32 * 1024 * 1024),
    )(x16, w1t, w2t, b2c, w3c, b3s)

    return out[0, :B]  # squeeze(-1) + drop batch padding


def init_params(key):
    """Deterministic init mimicking torch.nn.Linear default (U[-1/sqrt(fan_in), +])."""
    ks = jax.random.split(key, 6)

    def linear(kw, kb, fan_in, fan_out):
        bound = 1.0 / jnp.sqrt(float(fan_in))
        w = jax.random.uniform(kw, (fan_in, fan_out), jnp.float32, -bound, bound)
        b = jax.random.uniform(kb, (1, fan_out), jnp.float32, -bound, bound)
        return w, b

    w1, b1 = linear(ks[0], ks[1], FEAT_DIM, HIDDEN_DIM)
    w2, b2 = linear(ks[2], ks[3], HIDDEN_DIM, HIDDEN_DIM)
    w3, b3 = linear(ks[4], ks[5], HIDDEN_DIM, 1)
    return (w1, b1, w2, b2, w3, b3)


def _reference_forward(params, in_comp, action):
    """Pure-JAX reference (full-precision matmuls) for correctness checking."""
    hp = jax.lax.Precision.HIGHEST
    pair_idx = action[:, 0].astype(jnp.int32)
    pair_onehot = jax.nn.one_hot(pair_idx, NUM_CLASSES, dtype=jnp.float32)
    x = jnp.concatenate([in_comp, pair_onehot, action[:, 1:]], axis=-1)
    w1, b1, w2, b2, w3, b3 = params
    h1 = jnp.maximum(jnp.dot(x, w1, precision=hp) + b1, 0.0)
    h2 = jnp.maximum(jnp.dot(h1, w2, precision=hp) + b2, 0.0)
    return (jnp.dot(h2, w3, precision=hp) + b3)[:, 0]


# TODO(synk): train_step (Adam optimizer, MSE loss, grad clipping) is training
# machinery outside the forward pass and is not implemented as a kernel.


if __name__ == "__main__":
    key = jax.random.PRNGKey(0)
    k_param, k_in, k_idx, k_recov = jax.random.split(key, 4)

    B = 8  # small batch; kernel pads to one 128-wide tile internally
    params = init_params(k_param)

    in_comp = jax.random.normal(k_in, (B, INPUT_DIM), dtype=jnp.float32)
    pair_idx = jax.random.randint(k_idx, (B,), 0, NUM_CLASSES).astype(jnp.float32)
    recovs = jax.random.uniform(k_recov, (B, ACTION_DIM - 1), dtype=jnp.float32)
    action = jnp.concatenate([pair_idx[:, None], recovs], axis=-1)  # (B, 3)

    q_ref = _reference_forward(params, in_comp, action)

    # Default f32 path (matches the torch module's precision policy).
    fwd = jax.jit(functools.partial(column_critic_forward, params))
    q_val = jax.block_until_ready(fwd(in_comp, action))
    assert q_val.shape == (B,)
    # Tolerance covers any MXU f32-decomposition mode while still catching
    # structural errors (wrong one-hot / bias / weight orientation).
    assert jnp.allclose(q_val, q_ref, atol=1e-2, rtol=1e-2), (q_val, q_ref)

    # Optional mixed-precision path: bf16 MXU operands, f32 accumulation.
    fwd_bf16 = jax.jit(functools.partial(column_critic_forward, params,
                                         matmul_dtype=jnp.bfloat16))
    q_bf16 = jax.block_until_ready(fwd_bf16(in_comp, action))
    assert jnp.allclose(q_bf16, q_ref, atol=5e-2, rtol=5e-2), (q_bf16, q_ref)

    print("KERNEL_OK")
</pallas_src>

<mosaic_0001>
module attributes {stable_mosaic.version = 11 : i64} {
  func.func @_critic_kernel(%arg0: i32, %arg1: memref<16x128xf32, #tpu.memory_space<vmem>>, %arg2: memref<128x16xf32, #tpu.memory_space<vmem>>, %arg3: memref<128x128xf32, #tpu.memory_space<vmem>>, %arg4: memref<128x1xf32, #tpu.memory_space<vmem>>, %arg5: memref<128x1xf32, #tpu.memory_space<vmem>>, %arg6: memref<1x1xf32, #tpu.memory_space<smem>>, %arg7: memref<1x128xf32, #tpu.memory_space<vmem>>) attributes {dimension_semantics = [#tpu.dimension_semantics<parallel>], iteration_bounds = array<i64: 1>, scalar_prefetch = 0 : i64, scratch_operands = 0 : i64, tpu.core_type = #tpu.core_type<tc>, window_params = [{transform_indices = @transform_0, window_bounds = array<i64: 16, 128>}, {pipeline_mode = #tpu.pipeline_mode<synchronous>, transform_indices = @transform_1, window_bounds = array<i64: 128, 16>}, {pipeline_mode = #tpu.pipeline_mode<synchronous>, transform_indices = @transform_2, window_bounds = array<i64: 128, 128>}, {pipeline_mode = #tpu.pipeline_mode<synchronous>, transform_indices = @transform_3, window_bounds = array<i64: 128, 1>}, {pipeline_mode = #tpu.pipeline_mode<synchronous>, transform_indices = @transform_4, window_bounds = array<i64: 128, 1>}, {transform_indices = @transform_5, window_bounds = array<i64: 1, 1>}, {transform_indices = @transform_6, window_bounds = array<i64: 1, 128>}]} {
    %c0 = arith.constant 0 : index
    %c0_0 = arith.constant 0 : index
    %0 = vector.load %arg1[%c0, %c0_0] : memref<16x128xf32, #tpu.memory_space<vmem>>, vector<16x128xf32>
    %1 = tpu.iota {dimensions = array<i32: 0>} : vector<16x128xi32>
    %2 = vector.extract_strided_slice %0 {offsets = [13, 0], sizes = [1, 128], strides = [1, 1]} : vector<16x128xf32> to vector<1x128xf32>
    %3 = arith.fptosi %2 : vector<1x128xf32> to vector<1x128xi32>
    %c4_i32 = arith.constant 4 : i32
    %4 = vector.broadcast %c4_i32 : i32 to vector<16x128xi32>
    %5 = arith.cmpi sge, %1, %4 : vector<16x128xi32>
    %c10_i32 = arith.constant 10 : i32
    %6 = vector.broadcast %c10_i32 : i32 to vector<16x128xi32>
    %7 = arith.cmpi slt, %1, %6 : vector<16x128xi32>
    %8 = arith.andi %5, %7 : vector<16x128xi1>
    %c4_i32_1 = arith.constant 4 : i32
    %9 = vector.broadcast %c4_i32_1 : i32 to vector<16x128xi32>
    %10 = arith.subi %1, %9 : vector<16x128xi32>
    %11 = vector.broadcast %3 : vector<1x128xi32> to vector<16x128xi32>
    %12 = arith.cmpi eq, %11, %10 : vector<16x128xi32>
    %13 = arith.andi %8, %12 : vector<16x128xi1>
    %cst = arith.constant 1.000000e+00 : f32
    %14 = vector.broadcast %cst : f32 to vector<16x128xf32>
    %15 = arith.select %13, %14, %0 : vector<16x128xi1>, vector<16x128xf32>
    %c0_2 = arith.constant 0 : index
    %c0_3 = arith.constant 0 : index
    %16 = vector.load %arg2[%c0_2, %c0_3] : memref<128x16xf32, #tpu.memory_space<vmem>>, vector<128x16xf32>
    %cst_4 = arith.constant dense<0.000000e+00> : vector<128x128xf32>
    %17 = tpu.matmul %16, %15, %cst_4 {dimension_numbers = #tpu.dot_dimension_numbers<[1], [0], [0], [1], [0, 0, 1, 1], [], []>} : vector<128x16xf32>, vector<16x128xf32>, vector<128x128xf32> -> vector<128x128xf32>
    %cst_5 = arith.constant 0.000000e+00 : f32
    %18 = vector.broadcast %cst_5 : f32 to vector<128x128xf32>
    %19 = arith.maximumf %17, %18 : vector<128x128xf32>
    %c0_6 = arith.constant 0 : index
    %c0_7 = arith.constant 0 : index
    %20 = vector.load %arg3[%c0_6, %c0_7] : memref<128x128xf32, #tpu.memory_space<vmem>>, vector<128x128xf32>
    %cst_8 = arith.constant dense<0.000000e+00> : vector<128x128xf32>
    %21 = tpu.matmul %20, %19, %cst_8 {dimension_numbers = #tpu.dot_dimension_numbers<[1], [0], [0], [1], [0, 0, 1, 1], [], []>} : vector<128x128xf32>, vector<128x128xf32>, vector<128x128xf32> -> vector<128x128xf32>
    %c0_9 = arith.constant 0 : index
    %c0_10 = arith.constant 0 : index
    %22 = vector.load %arg4[%c0_9, %c0_10] : memref<128x1xf32, #tpu.memory_space<vmem>>, vector<128x1xf32>
    %23 = vector.broadcast %22 : vector<128x1xf32> to vector<128x128xf32>
    %24 = arith.addf %21, %23 : vector<128x128xf32>
    %cst_11 = arith.constant 0.000000e+00 : f32
    %25 = vector.broadcast %cst_11 : f32 to vector<128x128xf32>
    %26 = arith.maximumf %24, %25 : vector<128x128xf32>
    %c0_12 = arith.constant 0 : index
    %c0_13 = arith.constant 0 : index
    %27 = vector.load %arg5[%c0_12, %c0_13] : memref<128x1xf32, #tpu.memory_space<vmem>>, vector<128x1xf32>
    %28 = vector.broadcast %27 : vector<128x1xf32> to vector<128x128xf32>
    %29 = arith.mulf %26, %28 : vector<128x128xf32>
    %cst_14 = arith.constant dense<0.000000e+00> : vector<128xf32>
    %30 = vector.multi_reduction <add>, %29, %cst_14 [0] : vector<128x128xf32> to vector<128xf32>
    %31 = vector.shape_cast %30 : vector<128xf32> to vector<1x128xf32>
    %c0_15 = arith.constant 0 : index
    %c0_16 = arith.constant 0 : index
    %32 = memref.load %arg6[%c0_15, %c0_16] : memref<1x1xf32, #tpu.memory_space<smem>>
    %33 = vector.broadcast %32 : f32 to vector<1x128xf32>
    %34 = arith.addf %31, %33 : vector<1x128xf32>
    %c0_17 = arith.constant 0 : index
    %c0_18 = arith.constant 0 : index
    %35 = vector.load %arg7[%c0_17, %c0_18] : memref<1x128xf32, #tpu.memory_space<vmem>>, vector<1x128xf32>
    tpu.vector_store %arg7[%c0_17, %c0_18], %34 {strides = array<i32>} : memref<1x128xf32, #tpu.memory_space<vmem>>, vector<1x128xf32>,
    return
  }
  func.func @transform_0(%arg0: i32) -> (i32, i32) {
    %c0_i32 = arith.constant 0 : i32
    %c0_i32_0 = arith.constant 0 : i32
    return %c0_i32, %arg0 : i32, i32
  }
  func.func @transform_1(%arg0: i32) -> (i32, i32) {
    %c0_i32 = arith.constant 0 : i32
    %c0_i32_0 = arith.constant 0 : i32
    %c0_i32_1 = arith.constant 0 : i32
    return %c0_i32, %c0_i32_0 : i32, i32
  }
  func.func @transform_2(%arg0: i32) -> (i32, i32) {
    %c0_i32 = arith.constant 0 : i32
    %c0_i32_0 = arith.constant 0 : i32
    %c0_i32_1 = arith.constant 0 : i32
    return %c0_i32, %c0_i32_0 : i32, i32
  }
  func.func @transform_3(%arg0: i32) -> (i32, i32) {
    %c0_i32 = arith.constant 0 : i32
    %c0_i32_0 = arith.constant 0 : i32
    %c0_i32_1 = arith.constant 0 : i32
    return %c0_i32, %c0_i32_0 : i32, i32
  }
  func.func @transform_4(%arg0: i32) -> (i32, i32) {
    %c0_i32 = arith.constant 0 : i32
    %c0_i32_0 = arith.constant 0 : i32
    %c0_i32_1 = arith.constant 0 : i32
    return %c0_i32, %c0_i32_0 : i32, i32
  }
  func.func @transform_5(%arg0: i32) -> (i32, i32) {
    %c0_i32 = arith.constant 0 : i32
    %c0_i32_0 = arith.constant 0 : i32
    %c0_i32_1 = arith.constant 0 : i32
    return %c0_i32, %c0_i32_0 : i32, i32
  }
  func.func @transform_6(%arg0: i32) -> (i32, i32) {
    %c0_i32 = arith.constant 0 : i32
    %c0_i32_0 = arith.constant 0 : i32
    return %c0_i32, %arg0 : i32, i32
  }
}

</mosaic_0001>

<llo_original>
// kernel: column_critic_forward.1
$region0: #{column_critic_forward.1}
  #allocation0 [shape = 'u32[]', space=smem, size = 0x4, offset = 0x4, fixed_abs, tag = 'smem constant byte address 0x4 - core index']
  #allocation1 [shape = 'u32[72,128]{1,0:T(1,128)}', space=vmem, size = 0x9000, scoped, tag = 'internal scratch']
  #allocation2 [shape = 'f32[1,1]{1,0:T(1,128)S(6)}', space=smem, size = 0x200, scoped, tag = 'scoped memory for column_critic_forward.1']
  %s0 = inlined_call_operand.vmem [shape: f32[16,128], index: 0, kind: input, shape index: {}]
  %s1 = inlined_call_operand.hbm [shape: f32[128,16], index: 1, kind: input, shape index: {}]
  %s2 = inlined_call_operand.hbm [shape: f32[128,128], index: 2, kind: input, shape index: {}]
  %s3 = inlined_call_operand.hbm [shape: f32[128,1], index: 3, kind: input, shape index: {}]
  %s4 = inlined_call_operand.hbm [shape: f32[128,1], index: 4, kind: input, shape index: {}]
  %s5 = inlined_call_operand.<no memory space> [shape: f32[1,1], index: 5, kind: input, shape index: {}]
  %s6 = inlined_call_operand.vmem [shape: f32[1,128], index: 6, kind: output, shape index: {}]
  %s7 = sld [smem:[#allocation0]]
  $region50: #{column_critic_forward.1} parent=0
    _
  %s9 = ssub.s32 1, %s7
  %s10 = scalar_select 0, %s9, %s7
  %11 = sst [smem:[#allocation2]] %s5
  $region1: #{column_critic_forward.1} parent=0
    #allocation3 [shape = 'u8[65536]{0}', space=vmem, size = 0x10000, scoped, tag = 'input window, operand 1, single buffered']
    #allocation4 [shape = 's32[1]{0}', space=sflag, size = 0x4, scoped, tag = 'scoped memory for column_critic_forward.1']
    #allocation5 [shape = 'u8[65536]{0}', space=vmem, size = 0x10000, scoped, tag = 'input window, operand 2, single buffered']
    #allocation6 [shape = 's32[1]{0}', space=sflag, size = 0x4, scoped, tag = 'scoped memory for column_critic_forward.1']
    #allocation7 [shape = 'u8[65536]{0}', space=vmem, size = 0x10000, scoped, tag = 'input window, operand 3, single buffered']
    #allocation8 [shape = 'u8[65536]{0}', space=vmem, size = 0x10000, scoped, tag = 'input window, operand 4, single buffered']
    #allocation9 [shape = 's32[1]{0}', space=sflag, size = 0x4, scoped, tag = 'scoped memory for column_critic_forward.1']
    %12 = vsyncpa [#allocation4], 0
    %13 = vsyncpa [#allocation6], 0
    %14 = vsyncpa [#allocation9], 0
    // Predicated region
    $region2: #{column_critic_forward.1} parent=1 // pred_check
      _
    $region3: #{column_critic_forward.1} parent=1 // pred_check_branch
      %16 = sbr.rel (0) target = $region5
    $region4: #{column_critic_forward.1} parent=1 // pred_region
      _
    $region5: #{column_critic_forward.1} parent=1 // pred_fallthru
      _
    // Predicated region
    $region6: #{column_critic_forward.1} parent=1 // pred_check
      _
    $region7: #{column_critic_forward.1} parent=1 // pred_check_branch
      %18 = sbr.rel (0) target = $region9
    $region8: #{column_critic_forward.1} parent=1 // pred_region
      %20 = vsyncadd [#allocation4], 0
      %s21 = sshll.u32 %s1, 4
      %s22 = int_to_ptr.hbm [resolvable:$true] %s21
      %s23 = sshll.u32 [#allocation3], 4
      %s24 = int_to_ptr.vmem [resolvable:$true] %s23
      %29 = dma.hbm_to_vmem [thread:$0]  %s22, 2048, %s24, [#allocation4], 128, 128, 8
    $region9: #{column_critic_forward.1} parent=1 // pred_fallthru
      _
    // Predicated region
    $region10: #{column_critic_forward.1} parent=1 // pred_check
      _
    $region11: #{column_critic_forward.1} parent=1 // pred_check_branch
      %31 = sbr.rel (0) target = $region13
    $region12: #{column_critic_forward.1} parent=1 // pred_region
      %33 = vsyncadd [#allocation6], 0
      %s34 = sshll.u32 %s2, 4
      %s35 = int_to_ptr.hbm [resolvable:$true] %s34
      %s36 = sshll.u32 [#allocation5], 4
      %s37 = int_to_ptr.vmem [resolvable:$true] %s36
      %42 = dma.hbm_to_vmem [thread:$0]  %s35, 2048, %s37, [#allocation6], 128, 128, 8
    $region13: #{column_critic_forward.1} parent=1 // pred_fallthru
      _
    // Predicated region
    $region14: #{column_critic_forward.1} parent=1 // pred_check
      _
    $region15: #{column_critic_forward.1} parent=1 // pred_check_branch
      %44 = sbr.rel (0) target = $region17
    $region16: #{column_critic_forward.1} parent=1 // pred_region
      %46 = vsyncadd [#allocation6], 0
      %s47 = sshll.u32 %s3, 4
      %s48 = int_to_ptr.hbm [resolvable:$true] %s47
      %s49 = sshll.u32 [#allocation7], 4
      %s50 = int_to_ptr.vmem [resolvable:$true] %s49
      %55 = dma.hbm_to_vmem [thread:$0]  %s48, 2048, %s50, [#allocation6], 128, 128, 8
    $region17: #{column_critic_forward.1} parent=1 // pred_fallthru
      _
    // Predicated region
    $region18: #{column_critic_forward.1} parent=1 // pred_check
      _
    $region19: #{column_critic_forward.1} parent=1 // pred_check_branch
      %57 = sbr.rel (0) target = $region21
    $region20: #{column_critic_forward.1} parent=1 // pred_region
      %59 = vsyncadd [#allocation9], 0
      %s60 = sshll.u32 %s4, 4
      %s61 = int_to_ptr.hbm [resolvable:$true] %s60
      %s62 = sshll.u32 [#allocation8], 4
      %s63 = int_to_ptr.vmem [resolvable:$true] %s62
      %68 = dma.hbm_to_vmem [thread:$0]  %s61, 2048, %s63, [#allocation9], 128, 128, 8
    $region21: #{column_critic_forward.1} parent=1 // pred_fallthru
      _
    // Predicated region
    $region22: #{column_critic_forward.1} parent=1 // pred_check
      _
    $region23: #{column_critic_forward.1} parent=1 // pred_check_branch
      %70 = sbr.rel (0) target = $region25
    $region24: #{column_critic_forward.1} parent=1 // pred_region
      _
    $region25: #{column_critic_forward.1} parent=1 // pred_fallthru
      _
    // Predicated region
    $region26: #{column_critic_forward.1} parent=1 // pred_check
      _
    $region27: #{column_critic_forward.1} parent=1 // pred_check_branch
      %72 = sbr.rel (0) target = $region29
    $region28: #{column_critic_forward.1} parent=1 // pred_region
      %74 = dma.done [#allocation4], 2048
    $region29: #{column_critic_forward.1} parent=1 // pred_fallthru
      _
    // Predicated region
    $region30: #{column_critic_forward.1} parent=1 // pred_check
      _
    $region31: #{column_critic_forward.1} parent=1 // pred_check_branch
      %76 = sbr.rel (0) target = $region33
    $region32: #{column_critic_forward.1} parent=1 // pred_region
      %78 = dma.done [#allocation6], 2048
    $region33: #{column_critic_forward.1} parent=1 // pred_fallthru
      _
    // Predicated region
    $region34: #{column_critic_forward.1} parent=1 // pred_check
      _
    $region35: #{column_critic_forward.1} parent=1 // pred_check_branch
      %80 = sbr.rel (0) target = $region37
    $region36: #{column_critic_forward.1} parent=1 // pred_region
      %82 = dma.done [#allocation6], 2048
    $region37: #{column_critic_forward.1} parent=1 // pred_fallthru
      _
    // Predicated region
    $region38: #{column_critic_forward.1} parent=1 // pred_check
      _
    $region39: #{column_critic_forward.1} parent=1 // pred_check_branch
      %84 = sbr.rel (0) target = $region41
    $region40: #{column_critic_forward.1} parent=1 // pred_region
      %86 = dma.done [#allocation9], 2048
    $region41: #{column_critic_forward.1} parent=1 // pred_fallthru
      _
    %v87 = vld [vmem:[%s0] sm:$0xff]
    %v88 = vld [vmem:[%s0 + $0x8] sm:$0xff]
    %v89 = vlaneseq
    %v90 = vshrl.u32 %v89, 7
    %v91 = vadd.s32 %v90, 8
    %v92 = vcvt.f32.s32.to.zero.pseudo %v88
    %vm93 = vcmp.ge.s32.totalorder %v90, 4
    %vm94 = vcmp.ge.s32.totalorder %v91, 4
    %vm95 = vcmp.lt.s32.totalorder %v90, 10
    %vm96 = vcmp.lt.s32.totalorder %v91, 10
    %vm97 = vmand %vm93, %vm95
    %vm98 = vmand %vm94, %vm96
    %v99 = vsub.s32 %v90, 4
    %v100 = vsub.s32 %v91, 4
    %v101 = vperm.slane %v92, 5
    %vm102 = vcmp.eq.s32.totalorder %v101, %v99
    %vm103 = vcmp.eq.s32.totalorder %v101, %v100
    %vm104 = vmand %vm97, %vm102
    %vm105 = vmand %vm98, %vm103
    %v106 = vsel %vm104, 1.0, %v87
    %v107 = vsel %vm105, 1.0, %v88
    %v108 = vld [vmem:[#allocation3] sm:$0xff]
    %v109 = vld [vmem:[#allocation3 + $0x8] sm:$0xff]
    %v110 = vld [vmem:[#allocation3 + $0x10] sm:$0xff]
    %v111 = vld [vmem:[#allocation3 + $0x18] sm:$0xff]
    %v112 = vld [vmem:[#allocation3 + $0x20] sm:$0xff]
    %v113 = vld [vmem:[#allocation3 + $0x28] sm:$0xff]
    %v114 = vld [vmem:[#allocation3 + $0x30] sm:$0xff]
    %v115 = vld [vmem:[#allocation3 + $0x38] sm:$0xff]
    %v116 = vld [vmem:[#allocation3 + $0x40] sm:$0xff]
    %v117 = vld [vmem:[#allocation3 + $0x48] sm:$0xff]
    %v118 = vld [vmem:[#allocation3 + $0x50] sm:$0xff]
    %v119 = vld [vmem:[#allocation3 + $0x58] sm:$0xff]
    %v120 = vld [vmem:[#allocation3 + $0x60] sm:$0xff]
    %v121 = vld [vmem:[#allocation3 + $0x68] sm:$0xff]
    %v122 = vld [vmem:[#allocation3 + $0x70] sm:$0xff]
    %v123 = vld [vmem:[#allocation3 + $0x78] sm:$0xff]
    %vm124 = vcmask 130048
    %v126 = vsel %vm124, %v108, 0
    %v129 = vsel %vm124, %v109, 0
    %v132 = vsel %vm124, %v110, 0
    %v135 = vsel %vm124, %v111, 0
    %v138 = vsel %vm124, %v112, 0
    %v141 = vsel %vm124, %v113, 0
    %v144 = vsel %vm124, %v114, 0
    %v147 = vsel %vm124, %v115, 0
    %v150 = vsel %vm124, %v116, 0
    %v153 = vsel %vm124, %v117, 0
    %v156 = vsel %vm124, %v118, 0
    %v159 = vsel %vm124, %v119, 0
    %v162 = vsel %vm124, %v120, 0
    %v165 = vsel %vm124, %v121, 0
    %v168 = vsel %vm124, %v122, 0
    %v171 = vsel %vm124, %v123, 0
    %173 = vmatpush.msra.mxu0 0.0
    %174 = vmatpush.msra.mxu0 0.0
    %175 = vmatpush.msra.mxu0 0.0
    %176 = vmatpush.msra.mxu0 0.0
    %177 = vmatpush.msra.mxu0 0.0
    %178 = vmatpush.msra.mxu0 0.0
    %179 = vmatpush.msra.mxu0 0.0
    %180 = vmatpush.msra.mxu0 0.0
    %181 = vmatpush.msra.mxu0 0.0
    %182 = vmatpush.msra.mxu0 0.0
    %183 = vmatpush.msra.mxu0 0.0
    %184 = vmatpush.msra.mxu0 0.0
    %185 = vmatpush.msra.mxu0 0.0
    %186 = vmatpush.msra.mxu0 0.0
    %187 = vmatpush.msra.mxu0 %v107
    %188 = vmatpush.msra.mxu0 %v106
    %189 = vmatmul.f32.gmra.mxu0 %v126
    %v190 = vpop.f32.mrf.mxu0
    %v191 = vadd.f32 0.0, %v190
    %192 = vmatmul.f32.gmra.mxu0 %v129
    %v193 = vpop.f32.mrf.mxu0
    %v194 = vadd.f32 0.0, %v193
    %195 = vmatmul.f32.gmra.mxu0 %v132
    %v196 = vpop.f32.mrf.mxu0
    %v197 = vadd.f32 0.0, %v196
    %198 = vmatmul.f32.gmra.mxu0 %v135
    %v199 = vpop.f32.mrf.mxu0
    %v200 = vadd.f32 0.0, %v199
    %201 = vmatmul.f32.gmra.mxu0 %v138
    %v202 = vpop.f32.mrf.mxu0
    %v203 = vadd.f32 0.0, %v202
    %204 = vmatmul.f32.gmra.mxu0 %v141
    %v205 = vpop.f32.mrf.mxu0
    %v206 = vadd.f32 0.0, %v205
    %207 = vmatmul.f32.gmra.mxu0 %v144
    %v208 = vpop.f32.mrf.mxu0
    %v209 = vadd.f32 0.0, %v208
    %210 = vmatmul.f32.gmra.mxu0 %v147
    %v211 = vpop.f32.mrf.mxu0
    %v212 = vadd.f32 0.0, %v211
    %213 = vmatmul.f32.gmra.mxu0 %v150
    %v214 = vpop.f32.mrf.mxu0
    %v215 = vadd.f32 0.0, %v214
    %216 = vmatmul.f32.gmra.mxu0 %v153
    %v217 = vpop.f32.mrf.mxu0
    %v218 = vadd.f32 0.0, %v217
    %219 = vmatmul.f32.gmra.mxu0 %v156
    %v220 = vpop.f32.mrf.mxu0
    %v221 = vadd.f32 0.0, %v220
    %222 = vmatmul.f32.gmra.mxu0 %v159
    %v223 = vpop.f32.mrf.mxu0
    %v224 = vadd.f32 0.0, %v223
    %225 = vmatmul.f32.gmra.mxu0 %v162
    %v226 = vpop.f32.mrf.mxu0
    %v227 = vadd.f32 0.0, %v226
    %228 = vmatmul.f32.gmra.mxu0 %v165
    %v229 = vpop.f32.mrf.mxu0
    %v230 = vadd.f32 0.0, %v229
    %231 = vmatmul.f32.gmra.mxu0 %v168
    %v232 = vpop.f32.mrf.mxu0
    %v233 = vadd.f32 0.0, %v232
    %234 = vmatmul.f32.gmra.mxu0 %v171
    %v235 = vpop.f32.mrf.mxu0
    %v236 = vadd.f32 0.0, %v235
    %237 = vdwg.mxu0
    %v238 = vmax.f32 %v191, 0.0
    %v239 = vmax.f32 %v194, 0.0
    %v240 = vmax.f32 %v197, 0.0
    %v241 = vmax.f32 %v200, 0.0
    %v242 = vmax.f32 %v203, 0.0
    %v243 = vmax.f32 %v206, 0.0
    %v244 = vmax.f32 %v209, 0.0
    %v245 = vmax.f32 %v212, 0.0
    %v246 = vmax.f32 %v215, 0.0
    %v247 = vmax.f32 %v218, 0.0
    %v248 = vmax.f32 %v221, 0.0
    %v249 = vmax.f32 %v224, 0.0
    %v250 = vmax.f32 %v227, 0.0
    %v251 = vmax.f32 %v230, 0.0
    %v252 = vmax.f32 %v233, 0.0
    %v253 = vmax.f32 %v236, 0.0
    %v254 = vld [vmem:[#allocation5] sm:$0xff]
    %v255 = vld [vmem:[#allocation5 + $0x8] sm:$0xff]
    %v256 = vld [vmem:[#allocation5 + $0x10] sm:$0xff]
    %v257 = vld [vmem:[#allocation5 + $0x18] sm:$0xff]
    %v258 = vld [vmem:[#allocation5 + $0x20] sm:$0xff]
    %v259 = vld [vmem:[#allocation5 + $0x28] sm:$0xff]
    %v260 = vld [vmem:[#allocation5 + $0x30] sm:$0xff]
    %v261 = vld [vmem:[#allocation5 + $0x38] sm:$0xff]
    %v262 = vld [vmem:[#allocation5 + $0x40] sm:$0xff]
    %v263 = vld [vmem:[#allocation5 + $0x48] sm:$0xff]
    %v264 = vld [vmem:[#allocation5 + $0x50] sm:$0xff]
    %v265 = vld [vmem:[#allocation5 + $0x58] sm:$0xff]
    %v266 = vld [vmem:[#allocation5 + $0x60] sm:$0xff]
    %v267 = vld [vmem:[#allocation5 + $0x68] sm:$0xff]
    %v268 = vld [vmem:[#allocation5 + $0x70] sm:$0xff]
    %v269 = vld [vmem:[#allocation5 + $0x78] sm:$0xff]
    %v270 = vld [vmem:[#allocation7] sm:$0xff]
    %v271 = vld [vmem:[#allocation7 + $0x8] sm:$0xff]
    %v272 = vld [vmem:[#allocation7 + $0x10] sm:$0xff]
    %v273 = vld [vmem:[#allocation7 + $0x18] sm:$0xff]
    %v274 = vld [vmem:[#allocation7 + $0x20] sm:$0xff]
    %v275 = vld [vmem:[#allocation7 + $0x28] sm:$0xff]
    %v276 = vld [vmem:[#allocation7 + $0x30] sm:$0xff]
    %v277 = vld [vmem:[#allocation7 + $0x38] sm:$0xff]
    %v278 = vld [vmem:[#allocation7 + $0x40] sm:$0xff]
    %v279 = vld [vmem:[#allocation7 + $0x48] sm:$0xff]
    %v280 = vld [vmem:[#allocation7 + $0x50] sm:$0xff]
    %v281 = vld [vmem:[#allocation7 + $0x58] sm:$0xff]
    %v282 = vld [vmem:[#allocation7 + $0x60] sm:$0xff]
    %v283 = vld [vmem:[#allocation7 + $0x68] sm:$0xff]
    %v284 = vld [vmem:[#allocation7 + $0x70] sm:$0xff]
    %v285 = vld [vmem:[#allocation7 + $0x78] sm:$0xff]
    %287 = vset.pattern.permute.xlu0 0
    %288 = vperm.xlu0 %287, %v270
    %v289 = vpop.permute.xlu0 %288
    %292 = vset.pattern.permute.xlu0 0
    %293 = vperm.xlu0 %292, %v271
    %v294 = vpop.permute.xlu0 %293
    %297 = vset.pattern.permute.xlu0 0
    %298 = vperm.xlu0 %297, %v272
    %v299 = vpop.permute.xlu0 %298
    %302 = vset.pattern.permute.xlu0 0
    %303 = vperm.xlu0 %302, %v273
    %v304 = vpop.permute.xlu0 %303
    %307 = vset.pattern.permute.xlu0 0
    %308 = vperm.xlu0 %307, %v274
    %v309 = vpop.permute.xlu0 %308
    %312 = vset.pattern.permute.xlu0 0
    %313 = vperm.xlu0 %312, %v275
    %v314 = vpop.permute.xlu0 %313
    %317 = vset.pattern.permute.xlu0 0
    %318 = vperm.xlu0 %317, %v276
    %v319 = vpop.permute.xlu0 %318
    %322 = vset.pattern.permute.xlu0 0
    %323 = vperm.xlu0 %322, %v277
    %v324 = vpop.permute.xlu0 %323
    %327 = vset.pattern.permute.xlu0 0
    %328 = vperm.xlu0 %327, %v278
    %v329 = vpop.permute.xlu0 %328
    %332 = vset.pattern.permute.xlu0 0
    %333 = vperm.xlu0 %332, %v279
    %v334 = vpop.permute.xlu0 %333
    %337 = vset.pattern.permute.xlu0 0
    %338 = vperm.xlu0 %337, %v280
    %v339 = vpop.permute.xlu0 %338
    %342 = vset.pattern.permute.xlu0 0
    %343 = vperm.xlu0 %342, %v281
    %v344 = vpop.permute.xlu0 %343
    %347 = vset.pattern.permute.xlu0 0
    %348 = vperm.xlu0 %347, %v282
    %v349 = vpop.permute.xlu0 %348
    %352 = vset.pattern.permute.xlu0 0
    %353 = vperm.xlu0 %352, %v283
    %v354 = vpop.permute.xlu0 %353
    %357 = vset.pattern.permute.xlu0 0
    %358 = vperm.xlu0 %357, %v284
    %v359 = vpop.permute.xlu0 %358
    %362 = vset.pattern.permute.xlu0 0
    %363 = vperm.xlu0 %362, %v285
    %v364 = vpop.permute.xlu0 %363
    %366 = vmatpush.msra.mxu0 %v253
    %367 = vmatpush.msra.mxu0 %v252
    %368 = vmatpush.msra.mxu0 %v251
    %369 = vmatpush.msra.mxu0 %v250
    %370 = vmatpush.msra.mxu0 %v249
    %371 = vmatpush.msra.mxu0 %v248
    %372 = vmatpush.msra.mxu0 %v247
    %373 = vmatpush.msra.mxu0 %v246
    %374 = vmatpush.msra.mxu0 %v245
    %375 = vmatpush.msra.mxu0 %v244
    %376 = vmatpush.msra.mxu0 %v243
    %377 = vmatpush.msra.mxu0 %v242
    %378 = vmatpush.msra.mxu0 %v241
    %379 = vmatpush.msra.mxu0 %v240
    %380 = vmatpush.msra.mxu0 %v239
    %381 = vmatpush.msra.mxu0 %v238
    %382 = vmatmul.f32.gmra.mxu0 %v254
    %v383 = vpop.f32.mrf.mxu0
    %v384 = vadd.f32 %v289, %v383
    %385 = vmatmul.f32.gmra.mxu0 %v255
    %v386 = vpop.f32.mrf.mxu0
    %v387 = vadd.f32 %v294, %v386
    %388 = vmatmul.f32.gmra.mxu0 %v256
    %v389 = vpop.f32.mrf.mxu0
    %v390 = vadd.f32 %v299, %v389
    %391 = vmatmul.f32.gmra.mxu0 %v257
    %v392 = vpop.f32.mrf.mxu0
    %v393 = vadd.f32 %v304, %v392
    %394 = vmatmul.f32.gmra.mxu0 %v258
    %v395 = vpop.f32.mrf.mxu0
    %v396 = vadd.f32 %v309, %v395
    %397 = vmatmul.f32.gmra.mxu0 %v259
    %v398 = vpop.f32.mrf.mxu0
    %v399 = vadd.f32 %v314, %v398
    %400 = vmatmul.f32.gmra.mxu0 %v260
    %v401 = vpop.f32.mrf.mxu0
    %v402 = vadd.f32 %v319, %v401
    %403 = vmatmul.f32.gmra.mxu0 %v261
    %v404 = vpop.f32.mrf.mxu0
    %v405 = vadd.f32 %v324, %v404
    %406 = vmatmul.f32.gmra.mxu0 %v262
    %v407 = vpop.f32.mrf.mxu0
    %v408 = vadd.f32 %v329, %v407
    %409 = vmatmul.f32.gmra.mxu0 %v263
    %v410 = vpop.f32.mrf.mxu0
    %v411 = vadd.f32 %v334, %v410
    %412 = vmatmul.f32.gmra.mxu0 %v264
    %v413 = vpop.f32.mrf.mxu0
    %v414 = vadd.f32 %v339, %v413
    %415 = vmatmul.f32.gmra.mxu0 %v265
    %v416 = vpop.f32.mrf.mxu0
    %v417 = vadd.f32 %v344, %v416
    %418 = vmatmul.f32.gmra.mxu0 %v266
    %v419 = vpop.f32.mrf.mxu0
    %v420 = vadd.f32 %v349, %v419
    %421 = vmatmul.f32.gmra.mxu0 %v267
    %v422 = vpop.f32.mrf.mxu0
    %v423 = vadd.f32 %v354, %v422
    %424 = vmatmul.f32.gmra.mxu0 %v268
    %v425 = vpop.f32.mrf.mxu0
    %v426 = vadd.f32 %v359, %v425
    %427 = vmatmul.f32.gmra.mxu0 %v269
    %v428 = vpop.f32.mrf.mxu0
    %v429 = vadd.f32 %v364, %v428
    %430 = vdwg.mxu0
    %v431 = vmax.f32 %v384, 0.0
    %v432 = vmax.f32 %v387, 0.0
    %v433 = vmax.f32 %v390, 0.0
    %v434 = vmax.f32 %v393, 0.0
    %v435 = vmax.f32 %v396, 0.0
    %v436 = vmax.f32 %v399, 0.0
    %v437 = vmax.f32 %v402, 0.0
    %v438 = vmax.f32 %v405, 0.0
    %v439 = vmax.f32 %v408, 0.0
    %v440 = vmax.f32 %v411, 0.0
    %v441 = vmax.f32 %v414, 0.0
    %v442 = vmax.f32 %v417, 0.0
    %v443 = vmax.f32 %v420, 0.0
    %v444 = vmax.f32 %v423, 0.0
    %v445 = vmax.f32 %v426, 0.0
    %v446 = vmax.f32 %v429, 0.0
    %v447 = vld [vmem:[#allocation8] sm:$0xff]
    %v448 = vld [vmem:[#allocation8 + $0x8] sm:$0xff]
    %v449 = vld [vmem:[#allocation8 + $0x10] sm:$0xff]
    %v450 = vld [vmem:[#allocation8 + $0x18] sm:$0xff]
    %v451 = vld [vmem:[#allocation8 + $0x20] sm:$0xff]
    %v452 = vld [vmem:[#allocation8 + $0x28] sm:$0xff]
    %v453 = vld [vmem:[#allocation8 + $0x30] sm:$0xff]
    %v454 = vld [vmem:[#allocation8 + $0x38] sm:$0xff]
    %v455 = vld [vmem:[#allocation8 + $0x40] sm:$0xff]
    %v456 = vld [vmem:[#allocation8 + $0x48] sm:$0xff]
    %v457 = vld [vmem:[#allocation8 + $0x50] sm:$0xff]
    %v458 = vld [vmem:[#allocation8 + $0x58] sm:$0xff]
    %v459 = vld [vmem:[#allocation8 + $0x60] sm:$0xff]
    %v460 = vld [vmem:[#allocation8 + $0x68] sm:$0xff]
    %v461 = vld [vmem:[#allocation8 + $0x70] sm:$0xff]
    %v462 = vld [vmem:[#allocation8 + $0x78] sm:$0xff]
    %464 = vset.pattern.permute.xlu0 0
    %465 = vperm.xlu0 %464, %v447
    %v466 = vpop.permute.xlu0 %465
    %469 = vset.pattern.permute.xlu0 0
    %470 = vperm.xlu0 %469, %v448
    %v471 = vpop.permute.xlu0 %470
    %474 = vset.pattern.permute.xlu0 0
    %475 = vperm.xlu0 %474, %v449
    %v476 = vpop.permute.xlu0 %475
    %479 = vset.pattern.permute.xlu0 0
    %480 = vperm.xlu0 %479, %v450
    %v481 = vpop.permute.xlu0 %480
    %484 = vset.pattern.permute.xlu0 0
    %485 = vperm.xlu0 %484, %v451
    %v486 = vpop.permute.xlu0 %485
    %489 = vset.pattern.permute.xlu0 0
    %490 = vperm.xlu0 %489, %v452
    %v491 = vpop.permute.xlu0 %490
    %494 = vset.pattern.permute.xlu0 0
    %495 = vperm.xlu0 %494, %v453
    %v496 = vpop.permute.xlu0 %495
    %499 = vset.pattern.permute.xlu0 0
    %500 = vperm.xlu0 %499, %v454
    %v501 = vpop.permute.xlu0 %500
    %504 = vset.pattern.permute.xlu0 0
    %505 = vperm.xlu0 %504, %v455
    %v506 = vpop.permute.xlu0 %505
    %509 = vset.pattern.permute.xlu0 0
    %510 = vperm.xlu0 %509, %v456
    %v511 = vpop.permute.xlu0 %510
    %514 = vset.pattern.permute.xlu0 0
    %515 = vperm.xlu0 %514, %v457
    %v516 = vpop.permute.xlu0 %515
    %519 = vset.pattern.permute.xlu0 0
    %520 = vperm.xlu0 %519, %v458
    %v521 = vpop.permute.xlu0 %520
    %524 = vset.pattern.permute.xlu0 0
    %525 = vperm.xlu0 %524, %v459
    %v526 = vpop.permute.xlu0 %525
    %529 = vset.pattern.permute.xlu0 0
    %530 = vperm.xlu0 %529, %v460
    %v531 = vpop.permute.xlu0 %530
    %534 = vset.pattern.permute.xlu0 0
    %535 = vperm.xlu0 %534, %v461
    %v536 = vpop.permute.xlu0 %535
    %539 = vset.pattern.permute.xlu0 0
    %540 = vperm.xlu0 %539, %v462
    %v541 = vpop.permute.xlu0 %540
    %v543 = vmul.f32 %v431, %v466
    %v544 = vmul.f32 %v432, %v471
    %v545 = vmul.f32 %v433, %v476
    %v546 = vmul.f32 %v434, %v481
    %v547 = vmul.f32 %v435, %v486
    %v548 = vmul.f32 %v436, %v491
    %v549 = vmul.f32 %v437, %v496
    %v550 = vmul.f32 %v438, %v501
    %v551 = vmul.f32 %v439, %v506
    %v552 = vmul.f32 %v440, %v511
    %v553 = vmul.f32 %v441, %v516
    %v554 = vmul.f32 %v442, %v521
    %v555 = vmul.f32 %v443, %v526
    %v556 = vmul.f32 %v444, %v531
    %v557 = vmul.f32 %v445, %v536
    %v558 = vmul.f32 %v446, %v541
    %v559 = vadd.f32 %v543, %v544
    %v560 = vadd.f32 %v559, %v545
    %v561 = vadd.f32 %v560, %v546
    %v562 = vadd.f32 %v561, %v547
    %v563 = vadd.f32 %v562, %v548
    %v564 = vadd.f32 %v563, %v549
    %v565 = vadd.f32 %v564, %v550
    %v566 = vadd.f32 %v565, %v551
    %v567 = vadd.f32 %v566, %v552
    %v568 = vadd.f32 %v567, %v553
    %v569 = vadd.f32 %v568, %v554
    %v570 = vadd.f32 %v569, %v555
    %v571 = vadd.f32 %v570, %v556
    %v572 = vadd.f32 %v571, %v557
    %v573 = vadd.f32 %v572, %v558
    %v574 = vrot.slane %v573, 4
    %v575 = vadd.f32 %v573, %v574
    %v576 = vrot.slane %v575, 2
    %v577 = vadd.f32 %v575, %v576
    %v578 = vrot.slane %v577, 1
    %v579 = vadd.f32 %v577, %v578
    %s580 = sld [smem:[#allocation2]]
    %v581 = vstv %s580
    %v582 = vadd.f32 %v579, %v581
    %583 = vst [vmem:[%s6] sm:$0x1] %v582
    // Predicated region
    $region42: #{column_critic_forward.1} parent=1 // pred_check
      _
    $region43: #{column_critic_forward.1} parent=1 // pred_check_branch
      %585 = sbr.rel (0) target = $region45
    $region44: #{column_critic_forward.1} parent=1 // pred_region
      _
    $region45: #{column_critic_forward.1} parent=1 // pred_fallthru
      _
    // Predicated region
    $region46: #{column_critic_forward.1} parent=1 // pred_check
      _
    $region47: #{column_critic_forward.1} parent=1 // pred_check_branch
      %587 = sbr.rel (0) target = $region49
    $region48: #{column_critic_forward.1} parent=1 // pred_region
      _
    $region49: #{column_critic_forward.1} parent=1 // pred_fallthru
      _
    %588 = vsyncpa [#allocation4], 1
    %589 = vsyncpa [#allocation6], 1
    %590 = vsyncpa [#allocation9], 1

</llo_original>
